<compile_context>
chip_gen: v6e
topology: v6e:2x2x1
jax: 0.10.0
libtpu: 0.0.40
codegen_flags: <defaults>
</compile_context>

<pallas_src>
import jax
import jax.numpy as jnp
from jax import lax
from jax.experimental import pallas as pl
from jax.experimental.pallas import tpu as pltpu


def conv_transpose2d_forward(x, weight, bias, stride, padding,
                             output_padding=(0, 0), groups=1, dilation=(1, 1)):
    """x: [N, C_in, H, W]; weight: [C_in, C_out, kH, kW]; bias: [C_out] or None.
    Returns [N, C_out, H_out, W_out] float32 (matches F.conv_transpose2d)."""
    # TODO(synk): grouped transposed convolution (groups > 1) not implemented.
    assert groups == 1, "only groups=1 supported"

    N, C_in, H, W = x.shape
    _, C_out, kH, kW = weight.shape
    sH, sW = stride
    pH, pW = padding
    opH, opW = output_padding
    dH, dW = dilation

    H_out = (H - 1) * sH - 2 * pH + dH * (kH - 1) + opH + 1
    W_out = (W - 1) * sW - 2 * pW + dW * (kW - 1) + opW + 1
    K = W * C_in                  # contraction depth per kh tap-row (128 here)
    NF = W_out * C_out            # fused, lane-dense output width (512 here)

    # ---- wrapper glue (layout only, no real FLOPs) --------------------------
    # NCHW -> NHWC, dilate/pad ONLY the H axis (the W stride / padding / kw taps
    # are folded into the Toeplitz matrix R below), fuse (W, C_in) onto lanes.
    x_nhwc = jnp.transpose(x, (0, 2, 3, 1)).astype(jnp.float32)
    padH = dH * (kH - 1) - pH
    x_hd = lax.pad(x_nhwc, jnp.asarray(0.0, jnp.float32),
                   ((0, 0, 0), (padH, padH + opH, sH - 1), (0, 0, 0), (0, 0, 0)))
    H_pad = x_hd.shape[1]
    assert H_pad == H_out + dH * (kH - 1)
    x_hd = x_hd.reshape(N, H_pad, K).astype(jnp.bfloat16)

    # Spatially flipped weights -> (kH, kW, C_in, C_out).
    wflip = jnp.transpose(jnp.flip(weight, axis=(2, 3)), (2, 3, 0, 1))
    wflip = wflip.astype(jnp.float32)

    # Toeplitz fold of the W axis:
    #   R[kh, worig*C_in + c, w*C_out + co] = wflip[kh, kw, c, co]
    #     if  w + kw*dW == (dW*(kW-1) - pW) + worig*sW  for some kw in [0, kW)
    #     else 0.
    padW = dW * (kW - 1) - pW
    kw_i = jnp.arange(kW)[:, None, None]
    wo_i = jnp.arange(W)[None, :, None]
    w_i = jnp.arange(W_out)[None, None, :]
    sel = (w_i + kw_i * dW == padW + wo_i * sW).astype(jnp.float32)  # (kW, W, W_out)
    R = jnp.einsum('xvw,hxcd->hvcwd', sel, wflip)      # (kH, W, C_in, W_out, C_out)
    R = R.reshape(kH, K, NF).astype(jnp.bfloat16)

    if bias is None:
        b_row = jnp.zeros((1, NF), jnp.float32)
    else:
        b_row = jnp.tile(bias.astype(jnp.float32), (W_out,)).reshape(1, NF)

    # ---- Pallas kernel ------------------------------------------------------
    def kernel(x_ref, r_ref, b_ref, o_ref):
        # x_ref: (1, H_pad, K)   bf16, this sample (H interior-dilated + padded)
        # r_ref: (kH, K, NF)     bf16, VMEM-resident across the whole grid
        # b_ref: (1, NF)         f32,  VMEM-resident fused bias row
        # o_ref: (1, H_out, NF)  f32,  lane-dense output slab
        acc = jnp.zeros((H_out, NF), jnp.float32)
        for kh in range(kH):                               # static unroll
            lhs = x_ref[0, kh * dH: kh * dH + H_out, :]    # (H_out, K) bf16
            acc = acc + jnp.dot(lhs, r_ref[kh],
                                preferred_element_type=jnp.float32)
        o_ref[0] = acc + b_ref[...]                        # unmasked dense store

    out = pl.pallas_call(
        kernel,
        out_shape=jax.ShapeDtypeStruct((N, H_out, NF), jnp.float32),
        grid=(N,),
        in_specs=[
            pl.BlockSpec((1, H_pad, K), lambda n: (n, 0, 0)),
            pl.BlockSpec((kH, K, NF), lambda n: (0, 0, 0)),
            pl.BlockSpec((1, NF), lambda n: (0, 0)),
        ],
        out_specs=pl.BlockSpec((1, H_out, NF), lambda n: (n, 0, 0)),
        compiler_params=pltpu.CompilerParams(
            dimension_semantics=("parallel",)),
    )(x_hd, R, b_row)

    return jnp.transpose(out.reshape(N, H_out, W_out, C_out), (0, 3, 1, 2))


def _reference_conv_transpose2d(x, weight, bias, stride, padding,
                                output_padding, dilation):
    """Independent scatter-style reference (pure JAX, no conv primitives)."""
    N, C_in, H, W = x.shape
    _, C_out, kH, kW = weight.shape
    sH, sW = stride
    pH, pW = padding
    opH, opW = output_padding
    dH, dW = dilation
    H_out = (H - 1) * sH - 2 * pH + dH * (kH - 1) + opH + 1
    W_out = (W - 1) * sW - 2 * pW + dW * (kW - 1) + opW + 1
    H_full = (H - 1) * sH + dH * (kH - 1) + 1 + opH
    W_full = (W - 1) * sW + dW * (kW - 1) + 1 + opW
    y = jnp.zeros((N, C_out, H_full, W_full), jnp.float32)
    for kh in range(kH):
        for kw in range(kW):
            contrib = jnp.einsum('nchw,cd->ndhw', x, weight[:, :, kh, kw])
            y = y.at[:, :,
                     kh * dH: kh * dH + (H - 1) * sH + 1: sH,
                     kw * dW: kw * dW + (W - 1) * sW + 1: sW].add(contrib)
    y = y[:, :, pH:pH + H_out, pW:pW + W_out]
    if bias is not None:
        y = y + bias[None, :, None, None]
    return y


if __name__ == "__main__":
    key = jax.random.PRNGKey(0)
    k1, k2, k3 = jax.random.split(key, 3)

    # ConvTranspose2d(in=8, out=16, kernel=4, stride=2, padding=1) on 16x16 maps.
    N, C_in, C_out, H, W = 2, 8, 16, 16, 16
    kH = kW = 4
    stride, padding, output_padding, dilation = (2, 2), (1, 1), (0, 0), (1, 1)

    fan_in = C_in * kH * kW
    bound = 1.0 / float(jnp.sqrt(fan_in))
    weight = jax.random.uniform(k1, (C_in, C_out, kH, kW), jnp.float32,
                                -bound, bound)
    bias = jax.random.uniform(k2, (C_out,), jnp.float32, -bound, bound)
    x = jax.random.normal(k3, (N, C_in, H, W), jnp.float32)

    y = conv_transpose2d_forward(x, weight, bias, stride, padding,
                                 output_padding, 1, dilation)
    y = jax.block_until_ready(y)

    y_ref = _reference_conv_transpose2d(x, weight, bias, stride, padding,
                                        output_padding, dilation)
    assert y.shape == y_ref.shape == (N, C_out, 32, 32), y.shape
    max_err = float(jnp.max(jnp.abs(y - y_ref)))
    # bf16 inputs / f32 accumulation: loosened tolerance vs the f32 reference.
    assert jnp.allclose(y, y_ref, atol=2e-2, rtol=2e-2), \
        f"mismatch vs reference (max abs err {max_err})"

    print("KERNEL_OK")
</pallas_src>

<mosaic_0001>
module attributes {stable_mosaic.version = 11 : i64} {
  func.func @kernel(%arg0: i32, %arg1: memref<1x35x128xbf16, #tpu.memory_space<vmem>>, %arg2: memref<4x128x512xbf16, #tpu.memory_space<vmem>>, %arg3: memref<1x512xf32, #tpu.memory_space<vmem>>, %arg4: memref<1x32x512xf32, #tpu.memory_space<vmem>>) attributes {dimension_semantics = [#tpu.dimension_semantics<parallel>], iteration_bounds = array<i64: 2>, scalar_prefetch = 0 : i64, scratch_operands = 0 : i64, tpu.core_type = #tpu.core_type<tc>, window_params = [{transform_indices = @transform_0, window_bounds = array<i64: 1, 35, 128>}, {pipeline_mode = #tpu.pipeline_mode<synchronous>, transform_indices = @transform_1, window_bounds = array<i64: 4, 128, 512>}, {pipeline_mode = #tpu.pipeline_mode<synchronous>, transform_indices = @transform_2, window_bounds = array<i64: 1, 512>}, {transform_indices = @transform_3, window_bounds = array<i64: 1, 32, 512>}]} {
    %cst = arith.constant 0.000000e+00 : f32
    %0 = vector.broadcast %cst : f32 to vector<32x512xf32>
    %c0 = arith.constant 0 : index
    %c0_0 = arith.constant 0 : index
    %c0_1 = arith.constant 0 : index
    %1 = vector.load %arg1[%c0, %c0_0, %c0_1] : memref<1x35x128xbf16, #tpu.memory_space<vmem>>, vector<1x32x128xbf16>
    %2 = vector.shape_cast %1 : vector<1x32x128xbf16> to vector<32x128xbf16>
    %c0_2 = arith.constant 0 : index
    %c0_3 = arith.constant 0 : index
    %c0_4 = arith.constant 0 : index
    %3 = vector.load %arg2[%c0_2, %c0_3, %c0_4] : memref<4x128x512xbf16, #tpu.memory_space<vmem>>, vector<1x128x512xbf16>
    %4 = vector.shape_cast %3 : vector<1x128x512xbf16> to vector<128x512xbf16>
    %cst_5 = arith.constant dense<0.000000e+00> : vector<32x512xf32>
    %5 = tpu.matmul %2, %4, %cst_5 {dimension_numbers = #tpu.dot_dimension_numbers<[1], [0], [0], [1], [0, 0, 1, 1], [], []>} : vector<32x128xbf16>, vector<128x512xbf16>, vector<32x512xf32> -> vector<32x512xf32>
    %6 = arith.addf %0, %5 : vector<32x512xf32>
    %c0_6 = arith.constant 0 : index
    %c1 = arith.constant 1 : index
    %c0_7 = arith.constant 0 : index
    %7 = vector.load %arg1[%c0_6, %c1, %c0_7] : memref<1x35x128xbf16, #tpu.memory_space<vmem>>, vector<1x32x128xbf16>
    %8 = vector.shape_cast %7 : vector<1x32x128xbf16> to vector<32x128xbf16>
    %c1_8 = arith.constant 1 : index
    %c0_9 = arith.constant 0 : index
    %c0_10 = arith.constant 0 : index
    %9 = vector.load %arg2[%c1_8, %c0_9, %c0_10] : memref<4x128x512xbf16, #tpu.memory_space<vmem>>, vector<1x128x512xbf16>
    %10 = vector.shape_cast %9 : vector<1x128x512xbf16> to vector<128x512xbf16>
    %cst_11 = arith.constant dense<0.000000e+00> : vector<32x512xf32>
    %11 = tpu.matmul %8, %10, %cst_11 {dimension_numbers = #tpu.dot_dimension_numbers<[1], [0], [0], [1], [0, 0, 1, 1], [], []>} : vector<32x128xbf16>, vector<128x512xbf16>, vector<32x512xf32> -> vector<32x512xf32>
    %12 = arith.addf %6, %11 : vector<32x512xf32>
    %c0_12 = arith.constant 0 : index
    %c2 = arith.constant 2 : index
    %c0_13 = arith.constant 0 : index
    %13 = vector.load %arg1[%c0_12, %c2, %c0_13] : memref<1x35x128xbf16, #tpu.memory_space<vmem>>, vector<1x32x128xbf16>
    %14 = vector.shape_cast %13 : vector<1x32x128xbf16> to vector<32x128xbf16>
    %c2_14 = arith.constant 2 : index
    %c0_15 = arith.constant 0 : index
    %c0_16 = arith.constant 0 : index
    %15 = vector.load %arg2[%c2_14, %c0_15, %c0_16] : memref<4x128x512xbf16, #tpu.memory_space<vmem>>, vector<1x128x512xbf16>
    %16 = vector.shape_cast %15 : vector<1x128x512xbf16> to vector<128x512xbf16>
    %cst_17 = arith.constant dense<0.000000e+00> : vector<32x512xf32>
    %17 = tpu.matmul %14, %16, %cst_17 {dimension_numbers = #tpu.dot_dimension_numbers<[1], [0], [0], [1], [0, 0, 1, 1], [], []>} : vector<32x128xbf16>, vector<128x512xbf16>, vector<32x512xf32> -> vector<32x512xf32>
    %18 = arith.addf %12, %17 : vector<32x512xf32>
    %c0_18 = arith.constant 0 : index
    %c3 = arith.constant 3 : index
    %c0_19 = arith.constant 0 : index
    %19 = vector.load %arg1[%c0_18, %c3, %c0_19] : memref<1x35x128xbf16, #tpu.memory_space<vmem>>, vector<1x32x128xbf16>
    %20 = vector.shape_cast %19 : vector<1x32x128xbf16> to vector<32x128xbf16>
    %c3_20 = arith.constant 3 : index
    %c0_21 = arith.constant 0 : index
    %c0_22 = arith.constant 0 : index
    %21 = vector.load %arg2[%c3_20, %c0_21, %c0_22] : memref<4x128x512xbf16, #tpu.memory_space<vmem>>, vector<1x128x512xbf16>
    %22 = vector.shape_cast %21 : vector<1x128x512xbf16> to vector<128x512xbf16>
    %cst_23 = arith.constant dense<0.000000e+00> : vector<32x512xf32>
    %23 = tpu.matmul %20, %22, %cst_23 {dimension_numbers = #tpu.dot_dimension_numbers<[1], [0], [0], [1], [0, 0, 1, 1], [], []>} : vector<32x128xbf16>, vector<128x512xbf16>, vector<32x512xf32> -> vector<32x512xf32>
    %24 = arith.addf %18, %23 : vector<32x512xf32>
    %c0_24 = arith.constant 0 : index
    %c0_25 = arith.constant 0 : index
    %25 = vector.load %arg3[%c0_24, %c0_25] : memref<1x512xf32, #tpu.memory_space<vmem>>, vector<1x512xf32>
    %26 = vector.broadcast %25 : vector<1x512xf32> to vector<32x512xf32>
    %27 = arith.addf %24, %26 : vector<32x512xf32>
    %c0_26 = arith.constant 0 : index
    %c0_27 = arith.constant 0 : index
    %c0_28 = arith.constant 0 : index
    %28 = vector.load %arg4[%c0_26, %c0_27, %c0_28] : memref<1x32x512xf32, #tpu.memory_space<vmem>>, vector<1x32x512xf32>
    %29 = vector.shape_cast %28 : vector<1x32x512xf32> to vector<32x512xf32>
    %30 = vector.shape_cast %27 : vector<32x512xf32> to vector<1x32x512xf32>
    tpu.vector_store %arg4[%c0_26, %c0_27, %c0_28], %30 {strides = array<i32>} : memref<1x32x512xf32, #tpu.memory_space<vmem>>, vector<1x32x512xf32>,
    return
  }
  func.func @transform_0(%arg0: i32) -> (i32, i32, i32) {
    %c0_i32 = arith.constant 0 : i32
    %c0_i32_0 = arith.constant 0 : i32
    %c0_i32_1 = arith.constant 0 : i32
    return %arg0, %c0_i32, %c0_i32_0 : i32, i32, i32
  }
  func.func @transform_1(%arg0: i32) -> (i32, i32, i32) {
    %c0_i32 = arith.constant 0 : i32
    %c0_i32_0 = arith.constant 0 : i32
    %c0_i32_1 = arith.constant 0 : i32
    %c0_i32_2 = arith.constant 0 : i32
    return %c0_i32, %c0_i32_0, %c0_i32_1 : i32, i32, i32
  }
  func.func @transform_2(%arg0: i32) -> (i32, i32) {
    %c0_i32 = arith.constant 0 : i32
    %c0_i32_0 = arith.constant 0 : i32
    %c0_i32_1 = arith.constant 0 : i32
    return %c0_i32, %c0_i32_0 : i32, i32
  }
  func.func @transform_3(%arg0: i32) -> (i32, i32, i32) {
    %c0_i32 = arith.constant 0 : i32
    %c0_i32_0 = arith.constant 0 : i32
    %c0_i32_1 = arith.constant 0 : i32
    return %arg0, %c0_i32, %c0_i32_0 : i32, i32, i32
  }
}

</mosaic_0001>

<llo_original>
// kernel: tpu_custom_call.1
$region0: #{tpu_custom_call.1}
  #allocation0 [shape = 'u32[]', space=smem, size = 0x4, offset = 0x4, fixed_abs, tag = 'smem constant byte address 0x4 - core index']
  #allocation1 [shape = 'u32[144,128]{1,0:T(1,128)}', space=vmem, size = 0x12000, scoped, tag = 'internal scratch']
  %s0 = inlined_call_operand.vmem [shape: bf16[2,35,128], index: 0, kind: input, shape index: {}]
  %s1 = inlined_call_operand.hbm [shape: bf16[4,128,512], index: 1, kind: input, shape index: {}]
  %s2 = inlined_call_operand.vmem [shape: f32[1,512], index: 2, kind: input, shape index: {}]
  %s3 = inlined_call_operand.hbm [shape: f32[2,32,512], index: 3, kind: output, shape index: {}]
  %s4 = sld [smem:[#allocation0]]
  $region49: #{tpu_custom_call.1} parent=0
    _
  %s6 = ssub.s32 1, %s4
  %s7 = scalar_select 0, %s6, %s4
  $region1: #{tpu_custom_call.1} parent=0
    #allocation2 [shape = 'u8[524288]{0}', space=vmem, size = 0x80000, scoped, tag = 'input window, operand 1, single buffered']
    #allocation3 [shape = 's32[2]{0}', space=sflag, size = 0x8, scoped, tag = 'scoped memory for tpu_custom_call.1']
    #allocation4 [shape = 's32[2]{0}', space=sflag, size = 0x8, scoped, tag = 'scoped memory for tpu_custom_call.1']
    #allocation5 [shape = 'u8[131072]{0}', space=vmem, size = 0x20000, scoped, tag = 'output window, operand 0']
    %8 = vsyncpa [#allocation3], 0
    %9 = vsyncpa [#allocation4], 0
    %s10 = scalar_lea.sflag [#allocation4], 1
    %11 = vsyncpa %s10, 0
    loop: start=0, step=1, limit=4
    $region2: #{tpu_custom_call.1} parent=1 // loop_pre_header
      _
    $region3: #{tpu_custom_call.1} parent=1 // loop_header
      %s13 = sphi 0, %s17
      %p14 = scmp.ge.s32.totalorder %s13, 4
      %s23 = sphi 0, %s25
      %s26 = sphi 0, %s23
      %s27 = sphi 0, %s26
      %s43 = sphi 0, %s27
      %s47 = sphi 0, %s47
      %s49 = sphi 0, %s47
      %s50 = sphi 0, %s49
      %s64 = sphi 0, %s50
      %s68 = sphi 0, %s68
      %s70 = sphi 0, %s68
      %s71 = sphi 0, %s70
      %s85 = sphi 0, %s71
      %s91 = sphi 0, %s93
      %s94 = sphi 0, %s91
      %s95 = sphi 0, %s94
      %s111 = sphi 0, %s95
    $region4: #{tpu_custom_call.1} parent=1 // loop_header_branch
      %16 = sbr.rel (%p14) target = $region8
    $region5: #{tpu_custom_call.1} parent=1 // loop_body
      %s18 = ssub.s32 %s13, 1
      %s19 = ssub.s32 %s13, 2
      %s20 = sadd.s32 %s13, 1
      %s21 = ssub.s32 %s13, %s20
      %p22 = scmp.eq.s32.totalorder %s21, 0
      %s24 = sadd.s32 %s23, 1
      %s25 = scalar_select %p22, %s23, %s24
      %p28 = pneg %p22
      %p29 = scmp.eq.s32.totalorder %s13, 1
      %p30 = por %p28, %p29
      %p31 = scmp.ne.s32.totalorder %s23, %s26
      %p32 = scmp.eq.s32.totalorder %s13, 0
      %p33 = por %p31, %p32
      %p34 = scmp.ne.s32.totalorder %s23, %s26
      %p35 = scmp.eq.s32.totalorder %s18, 1
      %p36 = por %p34, %p35
      %p37 = scmp.ne.s32.totalorder %s26, %s27
      %p38 = scmp.eq.s32.totalorder %s18, 0
      %p39 = por %p37, %p38
      %p40 = scmp.ne.s32.totalorder %s26, %s27
      %p41 = scmp.eq.s32.totalorder %s19, 1
      %p42 = por %p40, %p41
      %p44 = scmp.ne.s32.totalorder %s27, %s43
      %p45 = scmp.eq.s32.totalorder %s19, 0
      %p46 = por %p44, %p45
      %s48 = sadd.s32 %s47, 1
      %p51 = scmp.eq.s32.totalorder %s13, 1
      %p52 = scmp.ne.s32.totalorder %s47, %s49
      %p53 = scmp.eq.s32.totalorder %s13, 0
      %p54 = por %p52, %p53
      %p55 = scmp.ne.s32.totalorder %s47, %s49
      %p56 = scmp.eq.s32.totalorder %s18, 1
      %p57 = por %p55, %p56
      %p58 = scmp.ne.s32.totalorder %s49, %s50
      %p59 = scmp.eq.s32.totalorder %s18, 0
      %p60 = por %p58, %p59
      %p61 = scmp.ne.s32.totalorder %s49, %s50
      %p62 = scmp.eq.s32.totalorder %s19, 1
      %p63 = por %p61, %p62
      %p65 = scmp.ne.s32.totalorder %s50, %s64
      %p66 = scmp.eq.s32.totalorder %s19, 0
      %p67 = por %p65, %p66
      %s69 = sadd.s32 %s68, 1
      %p72 = scmp.eq.s32.totalorder %s13, 1
      %p73 = scmp.ne.s32.totalorder %s68, %s70
      %p74 = scmp.eq.s32.totalorder %s13, 0
      %p75 = por %p73, %p74
      %p76 = scmp.ne.s32.totalorder %s68, %s70
      %p77 = scmp.eq.s32.totalorder %s18, 1
      %p78 = por %p76, %p77
      %p79 = scmp.ne.s32.totalorder %s70, %s71
      %p80 = scmp.eq.s32.totalorder %s18, 0
      %p81 = por %p79, %p80
      %p82 = scmp.ne.s32.totalorder %s70, %s71
      %p83 = scmp.eq.s32.totalorder %s19, 1
      %p84 = por %p82, %p83
      %p86 = scmp.ne.s32.totalorder %s71, %s85
      %p87 = scmp.eq.s32.totalorder %s19, 0
      %p88 = por %p86, %p87
      %s89 = ssub.s32 %s13, %s20
      %p90 = scmp.eq.s32.totalorder %s89, 0
      %s92 = sadd.s32 %s91, 1
      %s93 = scalar_select %p90, %s91, %s92
      %p96 = pneg %p90
      %p97 = scmp.eq.s32.totalorder %s13, 1
      %p98 = por %p96, %p97
      %p99 = scmp.ne.s32.totalorder %s91, %s94
      %p100 = scmp.eq.s32.totalorder %s13, 0
      %p101 = por %p99, %p100
      %p102 = scmp.ne.s32.totalorder %s91, %s94
      %p103 = scmp.eq.s32.totalorder %s18, 1
      %p104 = por %p102, %p103
      %p105 = scmp.ne.s32.totalorder %s94, %s95
      %p106 = scmp.eq.s32.totalorder %s18, 0
      %p107 = por %p105, %p106
      %p108 = scmp.ne.s32.totalorder %s94, %s95
      %p109 = scmp.eq.s32.totalorder %s19, 1
      %p110 = por %p108, %p109
      %p112 = scmp.ne.s32.totalorder %s95, %s111
      %p113 = scmp.eq.s32.totalorder %s19, 0
      %p114 = por %p112, %p113
      %p115 = scmp.le.s32.totalorder 1, %s13
      %p116 = scmp.lt.s32.totalorder %s13, 3
      %p117 = pnand %p115, %p116
      %p118 = pneg %p117
      // Predicated region
      $region9: #{tpu_custom_call.1} parent=5 // pred_check
        _
      $region10: #{tpu_custom_call.1} parent=5 // pred_check_branch
        %120 = sbr.rel (%p117) target = $region12
      $region11: #{tpu_custom_call.1} parent=5 // pred_region
        %s121 = ssub.s32 %s13, 1
        // Predicated region
        $region13: #{tpu_custom_call.1} parent=11 // pred_check
          %p122 = pneg %p60
        $region14: #{tpu_custom_call.1} parent=11 // pred_check_branch
          %124 = sbr.rel (%p122) target = $region16
        $region15: #{tpu_custom_call.1} parent=11 // pred_region
          %s126 = ssub.s32 16384, 16384
          %127 = vsyncadd [#allocation3], %s126
          %s128 = sshll.u32 [#allocation2], 4
          %s129 = int_to_ptr.vmem [resolvable:$true] %s128
          %134 = dma.hbm_to_vmem [thread:$0]  %s1, 16384, %s129, [#allocation3], 256, 256, 16
        $region16: #{tpu_custom_call.1} parent=11 // pred_fallthru
          _
        // Predicated region
        $region17: #{tpu_custom_call.1} parent=11 // pred_check
          %p135 = pneg %p81
        $region18: #{tpu_custom_call.1} parent=11 // pred_check_branch
          %137 = sbr.rel (%p135) target = $region20
        $region19: #{tpu_custom_call.1} parent=11 // pred_region
          _
        $region20: #{tpu_custom_call.1} parent=11 // pred_fallthru
          _
      $region12: #{tpu_custom_call.1} parent=5 // pred_fallthru
        _
      %p138 = scmp.lt.s32.totalorder %s13, 2
      // Predicated region
      $region21: #{tpu_custom_call.1} parent=5 // pred_check
        %p139 = pneg %p138
      $region22: #{tpu_custom_call.1} parent=5 // pred_check_branch
        %141 = sbr.rel (%p139) target = $region24
      $region23: #{tpu_custom_call.1} parent=5 // pred_region
        // Predicated region
        $region25: #{tpu_custom_call.1} parent=23 // pred_check
          %p142 = pneg %p33
        $region26: #{tpu_custom_call.1} parent=23 // pred_check_branch
          %144 = sbr.rel (%p142) target = $region28
        $region27: #{tpu_custom_call.1} parent=23 // pred_region
          %p145 = scmp.lt.s32.totalorder %s13, 1
          %s146 = scalar_select %p145, %s13, 1
          %s147 = smul.addr %s146, 5
          %s148 = smul.addr %s147, 4
          %s149 = scalar_lea.vmem %s0, %s148
        $region28: #{tpu_custom_call.1} parent=23 // pred_fallthru
          _
      $region24: #{tpu_custom_call.1} parent=5 // pred_fallthru
        _
      %p150 = scmp.le.s32.totalorder 1, %s13
      %p151 = scmp.lt.s32.totalorder %s13, 3
      %p152 = pnand %p150, %p151
      %p153 = pneg %p152
      // Predicated region
      $region29: #{tpu_custom_call.1} parent=5 // pred_check
        _
      $region30: #{tpu_custom_call.1} parent=5 // pred_check_branch
        %155 = sbr.rel (%p152) target = $region32
      $region31: #{tpu_custom_call.1} parent=5 // pred_region
        %s156 = ssub.s32 %s13, 1
        // Predicated region
        $region33: #{tpu_custom_call.1} parent=31 // pred_check
          %p157 = pneg %p60
        $region34: #{tpu_custom_call.1} parent=31 // pred_check_branch
          %159 = sbr.rel (%p157) target = $region36
        $region35: #{tpu_custom_call.1} parent=31 // pred_region
          %160 = dma.done [#allocation3], 16384
        $region36: #{tpu_custom_call.1} parent=31 // pred_fallthru
          _
        %p161 = scmp.lt.s32.totalorder %s18, 1
        %s162 = scalar_select %p161, %s18, 1
        %s163 = smul.addr %s162, 5
        %s164 = smul.addr %s163, 4
        %s165 = scalar_lea.vmem %s0, %s164
        %p166 = pneg %p39
        %p167 = pneg %p36
        %p168 = pneg %p60
        %p169 = pneg %p57
        %p170 = pneg %p81
        %p171 = pneg %p78
        %p172 = pneg %p107
        %p173 = pneg %p104
        %s174 = sand.u32 %s94, 1
        %s175 = scalar_lea.sflag [#allocation4], %s174
        %s176 = sand.u32 %s94, 1
        %s177 = smul.addr %s176, 128
        %s178 = scalar_lea.vmem [#allocation5], %s177
        %p179 = scmp.lt.s32.totalorder %s18, 1
        %s180 = scalar_select %p179, %s18, 1
        %s181 = smul.addr %s180, 5
        %s182 = smul.addr %s181, 4
        %s183 = scalar_lea.vmem %s0, %s182
        %v185 = vld [vmem:[%s183] sm:$0xf]
        %v186 = vld [vmem:[%s183 + $0x4] sm:$0xf]
        %v187 = vld [vmem:[%s183 + $0x8] sm:$0xf]
        %v188 = vld [vmem:[%s183 + $0xc] sm:$0xf]
        %v189 = vld [vmem:[#allocation2] sm:$0xff]
        %v190 = vld [vmem:[#allocation2 + $0x8] sm:$0xff]
        %v191 = vld [vmem:[#allocation2 + $0x10] sm:$0xff]
        %v192 = vld [vmem:[#allocation2 + $0x18] sm:$0xff]
        %v193 = vld [vmem:[#allocation2 + $0x20] sm:$0xff]
        %v194 = vld [vmem:[#allocation2 + $0x28] sm:$0xff]
        %v195 = vld [vmem:[#allocation2 + $0x30] sm:$0xff]
        %v196 = vld [vmem:[#allocation2 + $0x38] sm:$0xff]
        %v197 = vld [vmem:[#allocation2 + $0x40] sm:$0xff]
        %v198 = vld [vmem:[#allocation2 + $0x48] sm:$0xff]
        %v199 = vld [vmem:[#allocation2 + $0x50] sm:$0xff]
        %v200 = vld [vmem:[#allocation2 + $0x58] sm:$0xff]
        %v201 = vld [vmem:[#allocation2 + $0x60] sm:$0xff]
        %v202 = vld [vmem:[#allocation2 + $0x68] sm:$0xff]
        %v203 = vld [vmem:[#allocation2 + $0x70] sm:$0xff]
        %v204 = vld [vmem:[#allocation2 + $0x78] sm:$0xff]
        %v205 = vld [vmem:[#allocation2 + $0x80] sm:$0xff]
        %v206 = vld [vmem:[#allocation2 + $0x88] sm:$0xff]
        %v207 = vld [vmem:[#allocation2 + $0x90] sm:$0xff]
        %v208 = vld [vmem:[#allocation2 + $0x98] sm:$0xff]
        %v209 = vld [vmem:[#allocation2 + $0xa0] sm:$0xff]
        %v210 = vld [vmem:[#allocation2 + $0xa8] sm:$0xff]
        %v211 = vld [vmem:[#allocation2 + $0xb0] sm:$0xff]
        %v212 = vld [vmem:[#allocation2 + $0xb8] sm:$0xff]
        %v213 = vld [vmem:[#allocation2 + $0xc0] sm:$0xff]
        %v214 = vld [vmem:[#allocation2 + $0xc8] sm:$0xff]
        %v215 = vld [vmem:[#allocation2 + $0xd0] sm:$0xff]
        %v216 = vld [vmem:[#allocation2 + $0xd8] sm:$0xff]
        %v217 = vld [vmem:[#allocation2 + $0xe0] sm:$0xff]
        %v218 = vld [vmem:[#allocation2 + $0xe8] sm:$0xff]
        %v219 = vld [vmem:[#allocation2 + $0xf0] sm:$0xff]
        %v220 = vld [vmem:[#allocation2 + $0xf8] sm:$0xff]
        %v221 = vld [vmem:[%s183 + $0x10] sm:$0x1]
        %s222 = scalar_lea.vmem [#allocation2], 256
        %v223 = vld [vmem:[%s222] sm:$0xff]
        %v224 = vld [vmem:[%s222 + $0x8] sm:$0xff]
        %v225 = vld [vmem:[%s222 + $0x10] sm:$0xff]
        %v226 = vld [vmem:[%s222 + $0x18] sm:$0xff]
        %v227 = vld [vmem:[%s222 + $0x20] sm:$0xff]
        %v228 = vld [vmem:[%s222 + $0x28] sm:$0xff]
        %v229 = vld [vmem:[%s222 + $0x30] sm:$0xff]
        %v230 = vld [vmem:[%s222 + $0x38] sm:$0xff]
        %v231 = vld [vmem:[%s222 + $0x40] sm:$0xff]
        %v232 = vld [vmem:[%s222 + $0x48] sm:$0xff]
        %v233 = vld [vmem:[%s222 + $0x50] sm:$0xff]
        %v234 = vld [vmem:[%s222 + $0x58] sm:$0xff]
        %v235 = vld [vmem:[%s222 + $0x60] sm:$0xff]
        %v236 = vld [vmem:[%s222 + $0x68] sm:$0xff]
        %v237 = vld [vmem:[%s222 + $0x70] sm:$0xff]
        %v238 = vld [vmem:[%s222 + $0x78] sm:$0xff]
        %v239 = vld [vmem:[%s222 + $0x80] sm:$0xff]
        %v240 = vld [vmem:[%s222 + $0x88] sm:$0xff]
        %v241 = vld [vmem:[%s222 + $0x90] sm:$0xff]
        %v242 = vld [vmem:[%s222 + $0x98] sm:$0xff]
        %v243 = vld [vmem:[%s222 + $0xa0] sm:$0xff]
        %v244 = vld [vmem:[%s222 + $0xa8] sm:$0xff]
        %v245 = vld [vmem:[%s222 + $0xb0] sm:$0xff]
        %v246 = vld [vmem:[%s222 + $0xb8] sm:$0xff]
        %v247 = vld [vmem:[%s222 + $0xc0] sm:$0xff]
        %v248 = vld [vmem:[%s222 + $0xc8] sm:$0xff]
        %v249 = vld [vmem:[%s222 + $0xd0] sm:$0xff]
        %v250 = vld [vmem:[%s222 + $0xd8] sm:$0xff]
        %v251 = vld [vmem:[%s222 + $0xe0] sm:$0xff]
        %v252 = vld [vmem:[%s222 + $0xe8] sm:$0xff]
        %v253 = vld [vmem:[%s222 + $0xf0] sm:$0xff]
        %v254 = vld [vmem:[%s222 + $0xf8] sm:$0xff]
        %v260 = vunpack.c.l.b16 %v185
        %v261 = vunpack.c.l.b16 %v186
        %v262 = vunpack.c.l.b16 %v187
        %v263 = vunpack.c.l.b16 %v188
        %v264 = vunpack.c.l.b16 %v221
        %v265 = vpack.c.b16 %v261, %v260
        %v266 = vpack.c.b16 %v263, %v262
        %v267 = vpack.c.b16 %v264, %v264
        %vm268 = vsmask.f32 7424
        %v270 = vshrl.u32 %v265, 16
        %v272 = vshll.u32 %v265, 16
        %v274 = vrot.slane %v272, 1
        %v275 = vor.u32 %v270, %v274
        %v277 = vshll.u32 %v266, 16
        %v279 = vrot.slane %v277, 1
        %v280 = vsel %vm268, %v275, %v279
        %v281 = vshrl.u32 %v266, 16
        %v283 = vor.u32 %v281, %v279
        %v285 = vshll.u32 %v267, 16
        %v287 = vrot.slane %v285, 1
        %v288 = vsel %vm268, %v283, %v287
        %v323 = vunpack.c.l.b16 %v223
        %v324 = vunpack.c.h.b16 %v223
        %v325 = vunpack.c.l.b16 %v224
        %v326 = vunpack.c.h.b16 %v224
        %v327 = vunpack.c.l.b16 %v225
        %v328 = vunpack.c.h.b16 %v225
        %v329 = vunpack.c.l.b16 %v226
        %v330 = vunpack.c.h.b16 %v226
        %v331 = vunpack.c.l.b16 %v227
        %v332 = vunpack.c.h.b16 %v227
        %v333 = vunpack.c.l.b16 %v228
        %v334 = vunpack.c.h.b16 %v228
        %v335 = vunpack.c.l.b16 %v229
        %v336 = vunpack.c.h.b16 %v229
        %v337 = vunpack.c.l.b16 %v230
        %v338 = vunpack.c.h.b16 %v230
        %v339 = vunpack.c.l.b16 %v231
        %v340 = vunpack.c.h.b16 %v231
        %v341 = vunpack.c.l.b16 %v232
        %v342 = vunpack.c.h.b16 %v232
        %v343 = vunpack.c.l.b16 %v233
        %v344 = vunpack.c.h.b16 %v233
        %v345 = vunpack.c.l.b16 %v234
        %v346 = vunpack.c.h.b16 %v234
        %v347 = vunpack.c.l.b16 %v235
        %v348 = vunpack.c.h.b16 %v235
        %v349 = vunpack.c.l.b16 %v236
        %v350 = vunpack.c.h.b16 %v236
        %v351 = vunpack.c.l.b16 %v237
        %v352 = vunpack.c.h.b16 %v237
        %v353 = vunpack.c.l.b16 %v238
        %v354 = vunpack.c.h.b16 %v238
        %v355 = vunpack.c.l.b16 %v239
        %v356 = vunpack.c.h.b16 %v239
        %v357 = vunpack.c.l.b16 %v240
        %v358 = vunpack.c.h.b16 %v240
        %v359 = vunpack.c.l.b16 %v241
        %v360 = vunpack.c.h.b16 %v241
        %v361 = vunpack.c.l.b16 %v242
        %v362 = vunpack.c.h.b16 %v242
        %v363 = vunpack.c.l.b16 %v243
        %v364 = vunpack.c.h.b16 %v243
        %v365 = vunpack.c.l.b16 %v244
        %v366 = vunpack.c.h.b16 %v244
        %v367 = vunpack.c.l.b16 %v245
        %v368 = vunpack.c.h.b16 %v245
        %v369 = vunpack.c.l.b16 %v246
        %v370 = vunpack.c.h.b16 %v246
        %v371 = vunpack.c.l.b16 %v247
        %v372 = vunpack.c.h.b16 %v247
        %v373 = vunpack.c.l.b16 %v248
        %v374 = vunpack.c.h.b16 %v248
        %v375 = vunpack.c.l.b16 %v249
        %v376 = vunpack.c.h.b16 %v249
        %v377 = vunpack.c.l.b16 %v250
        %v378 = vunpack.c.h.b16 %v250
        %v379 = vunpack.c.l.b16 %v251
        %v380 = vunpack.c.h.b16 %v251
        %v381 = vunpack.c.l.b16 %v252
        %v382 = vunpack.c.h.b16 %v252
        %v383 = vunpack.c.l.b16 %v253
        %v384 = vunpack.c.h.b16 %v253
        %v385 = vunpack.c.l.b16 %v254
        %v386 = vunpack.c.h.b16 %v254
        %v387 = vpack.c.b16 %v327, %v323
        %v388 = vpack.c.b16 %v328, %v324
        %v389 = vpack.c.b16 %v329, %v325
        %v390 = vpack.c.b16 %v330, %v326
        %v391 = vpack.c.b16 %v335, %v331
        %v392 = vpack.c.b16 %v336, %v332
        %v393 = vpack.c.b16 %v337, %v333
        %v394 = vpack.c.b16 %v338, %v334
        %v395 = vpack.c.b16 %v343, %v339
        %v396 = vpack.c.b16 %v344, %v340
        %v397 = vpack.c.b16 %v345, %v341
        %v398 = vpack.c.b16 %v346, %v342
        %v399 = vpack.c.b16 %v351, %v347
        %v400 = vpack.c.b16 %v352, %v348
        %v401 = vpack.c.b16 %v353, %v349
        %v402 = vpack.c.b16 %v354, %v350
        %v403 = vpack.c.b16 %v359, %v355
        %v404 = vpack.c.b16 %v360, %v356
        %v405 = vpack.c.b16 %v361, %v357
        %v406 = vpack.c.b16 %v362, %v358
        %v407 = vpack.c.b16 %v367, %v363
        %v408 = vpack.c.b16 %v368, %v364
        %v409 = vpack.c.b16 %v369, %v365
        %v410 = vpack.c.b16 %v370, %v366
        %v411 = vpack.c.b16 %v375, %v371
        %v412 = vpack.c.b16 %v376, %v372
        %v413 = vpack.c.b16 %v377, %v373
        %v414 = vpack.c.b16 %v378, %v374
        %v415 = vpack.c.b16 %v383, %v379
        %v416 = vpack.c.b16 %v384, %v380
        %v417 = vpack.c.b16 %v385, %v381
        %v418 = vpack.c.b16 %v386, %v382
        %451 = vmatprep.subr.bf16.mxu0 %v416
        %452 = vmatpush1.bf16.msra.mxu0 %v415
        %453 = vmatprep.subr.bf16.mxu0 %v412
        %454 = vmatpush1.bf16.msra.mxu0 %v411
        %455 = vmatprep.subr.bf16.mxu0 %v408
        %456 = vmatpush1.bf16.msra.mxu0 %v407
        %457 = vmatprep.subr.bf16.mxu0 %v404
        %458 = vmatpush1.bf16.msra.mxu0 %v403
        %459 = vmatprep.subr.bf16.mxu0 %v400
        %460 = vmatpush1.bf16.msra.mxu0 %v399
        %461 = vmatprep.subr.bf16.mxu0 %v396
        %462 = vmatpush1.bf16.msra.mxu0 %v395
        %463 = vmatprep.subr.bf16.mxu0 %v392
        %464 = vmatpush1.bf16.msra.mxu0 %v391
        %465 = vmatprep.subr.bf16.mxu0 %v388
        %466 = vmatpush1.bf16.msra.mxu0 %v387
        %467 = vmatprep.subr.bf16.mxu0 0
        %468 = vmatpush2.bf16.msra.mxu0 0
        %469 = vmatprep.subr.bf16.mxu0 0
        %470 = vmatpush2.bf16.msra.mxu0 0
        %471 = vmatprep.subr.bf16.mxu0 0
        %472 = vmatpush2.bf16.msra.mxu0 0
        %473 = vmatprep.subr.bf16.mxu0 0
        %474 = vmatpush2.bf16.msra.mxu0 0
        %475 = vmatprep.subr.bf16.mxu0 0
        %476 = vmatpush2.bf16.msra.mxu0 0
        %477 = vmatprep.subr.bf16.mxu0 0
        %478 = vmatpush2.bf16.msra.mxu0 0
        %479 = vmatprep.subr.bf16.mxu0 0
        %480 = vmatpush2.bf16.msra.mxu0 0
        %481 = vmatprep.subr.bf16.mxu0 0
        %482 = vmatpush2.bf16.msra.mxu0 0
        %483 = vmatprep.mubr.bf16.mxu0 0
        %484 = vmatmul.mubr.bf16.gmra.mxu0 %v280
        %v485 = vpop.f32.mrf.mxu0
        %v486 = vadd.f32 0.0, %v485
        %v487 = vpop.f32.mrf.mxu0
        %v488 = vadd.f32 0.0, %v487
        %v489 = vpop.f32.mrf.mxu0
        %v490 = vadd.f32 0.0, %v489
        %v491 = vpop.f32.mrf.mxu0
        %v492 = vadd.f32 0.0, %v491
        %493 = vmatprep.mubr.bf16.mxu0 0
        %494 = vmatmul.mubr.bf16.gmra.mxu0 %v288
        %v495 = vpop.f32.mrf.mxu0
        %v496 = vadd.f32 0.0, %v495
        %v497 = vpop.f32.mrf.mxu0
        %v498 = vadd.f32 0.0, %v497
        %v499 = vpop.f32.mrf.mxu0
        %v500 = vadd.f32 0.0, %v499
        %v501 = vpop.f32.mrf.mxu0
        %v502 = vadd.f32 0.0, %v501
        %503 = vdwg.mxu0
        %504 = vmatprep.subr.bf16.mxu0 %v418
        %505 = vmatpush1.bf16.msra.mxu0 %v417
        %506 = vmatprep.subr.bf16.mxu0 %v414
        %507 = vmatpush1.bf16.msra.mxu0 %v413
        %508 = vmatprep.subr.bf16.mxu0 %v410
        %509 = vmatpush1.bf16.msra.mxu0 %v409
        %510 = vmatprep.subr.bf16.mxu0 %v406
        %511 = vmatpush1.bf16.msra.mxu0 %v405
        %512 = vmatprep.subr.bf16.mxu0 %v402
        %513 = vmatpush1.bf16.msra.mxu0 %v401
        %514 = vmatprep.subr.bf16.mxu0 %v398
        %515 = vmatpush1.bf16.msra.mxu0 %v397
        %516 = vmatprep.subr.bf16.mxu0 %v394
        %517 = vmatpush1.bf16.msra.mxu0 %v393
        %518 = vmatprep.subr.bf16.mxu0 %v390
        %519 = vmatpush1.bf16.msra.mxu0 %v389
        %520 = vmatprep.subr.bf16.mxu0 0
        %521 = vmatpush2.bf16.msra.mxu0 0
        %522 = vmatprep.subr.bf16.mxu0 0
        %523 = vmatpush2.bf16.msra.mxu0 0
        %524 = vmatprep.subr.bf16.mxu0 0
        %525 = vmatpush2.bf16.msra.mxu0 0
        %526 = vmatprep.subr.bf16.mxu0 0
        %527 = vmatpush2.bf16.msra.mxu0 0
        %528 = vmatprep.subr.bf16.mxu0 0
        %529 = vmatpush2.bf16.msra.mxu0 0
        %530 = vmatprep.subr.bf16.mxu0 0
        %531 = vmatpush2.bf16.msra.mxu0 0
        %532 = vmatprep.subr.bf16.mxu0 0
        %533 = vmatpush2.bf16.msra.mxu0 0
        %534 = vmatprep.subr.bf16.mxu0 0
        %535 = vmatpush2.bf16.msra.mxu0 0
        %536 = vmatprep.mubr.bf16.mxu0 0
        %537 = vmatmul.mubr.bf16.gmra.mxu0 %v280
        %v538 = vpop.f32.mrf.mxu0
        %v539 = vadd.f32 0.0, %v538
        %v540 = vpop.f32.mrf.mxu0
        %v541 = vadd.f32 0.0, %v540
        %v542 = vpop.f32.mrf.mxu0
        %v543 = vadd.f32 0.0, %v542
        %v544 = vpop.f32.mrf.mxu0
        %v545 = vadd.f32 0.0, %v544
        %546 = vmatprep.mubr.bf16.mxu0 0
        %547 = vmatmul.mubr.bf16.gmra.mxu0 %v288
        %v548 = vpop.f32.mrf.mxu0
        %v549 = vadd.f32 0.0, %v548
        %v550 = vpop.f32.mrf.mxu0
        %v551 = vadd.f32 0.0, %v550
        %v552 = vpop.f32.mrf.mxu0
        %v553 = vadd.f32 0.0, %v552
        %v554 = vpop.f32.mrf.mxu0
        %v555 = vadd.f32 0.0, %v554
        %556 = vdwg.mxu0
        %v591 = vunpack.c.l.b16 %v189
        %v592 = vunpack.c.h.b16 %v189
        %v593 = vunpack.c.l.b16 %v190
        %v594 = vunpack.c.h.b16 %v190
        %v595 = vunpack.c.l.b16 %v191
        %v596 = vunpack.c.h.b16 %v191
        %v597 = vunpack.c.l.b16 %v192
        %v598 = vunpack.c.h.b16 %v192
        %v599 = vunpack.c.l.b16 %v193
        %v600 = vunpack.c.h.b16 %v193
        %v601 = vunpack.c.l.b16 %v194
        %v602 = vunpack.c.h.b16 %v194
        %v603 = vunpack.c.l.b16 %v195
        %v604 = vunpack.c.h.b16 %v195
        %v605 = vunpack.c.l.b16 %v196
        %v606 = vunpack.c.h.b16 %v196
        %v607 = vunpack.c.l.b16 %v197
        %v608 = vunpack.c.h.b16 %v197
        %v609 = vunpack.c.l.b16 %v198
        %v610 = vunpack.c.h.b16 %v198
        %v611 = vunpack.c.l.b16 %v199
        %v612 = vunpack.c.h.b16 %v199
        %v613 = vunpack.c.l.b16 %v200
        %v614 = vunpack.c.h.b16 %v200
        %v615 = vunpack.c.l.b16 %v201
        %v616 = vunpack.c.h.b16 %v201
        %v617 = vunpack.c.l.b16 %v202
        %v618 = vunpack.c.h.b16 %v202
        %v619 = vunpack.c.l.b16 %v203
        %v620 = vunpack.c.h.b16 %v203
        %v621 = vunpack.c.l.b16 %v204
        %v622 = vunpack.c.h.b16 %v204
        %v623 = vunpack.c.l.b16 %v205
        %v624 = vunpack.c.h.b16 %v205
        %v625 = vunpack.c.l.b16 %v206
        %v626 = vunpack.c.h.b16 %v206
        %v627 = vunpack.c.l.b16 %v207
        %v628 = vunpack.c.h.b16 %v207
        %v629 = vunpack.c.l.b16 %v208
        %v630 = vunpack.c.h.b16 %v208
        %v631 = vunpack.c.l.b16 %v209
        %v632 = vunpack.c.h.b16 %v209
        %v633 = vunpack.c.l.b16 %v210
        %v634 = vunpack.c.h.b16 %v210
        %v635 = vunpack.c.l.b16 %v211
        %v636 = vunpack.c.h.b16 %v211
        %v637 = vunpack.c.l.b16 %v212
        %v638 = vunpack.c.h.b16 %v212
        %v639 = vunpack.c.l.b16 %v213
        %v640 = vunpack.c.h.b16 %v213
        %v641 = vunpack.c.l.b16 %v214
        %v642 = vunpack.c.h.b16 %v214
        %v643 = vunpack.c.l.b16 %v215
        %v644 = vunpack.c.h.b16 %v215
        %v645 = vunpack.c.l.b16 %v216
        %v646 = vunpack.c.h.b16 %v216
        %v647 = vunpack.c.l.b16 %v217
        %v648 = vunpack.c.h.b16 %v217
        %v649 = vunpack.c.l.b16 %v218
        %v650 = vunpack.c.h.b16 %v218
        %v651 = vunpack.c.l.b16 %v219
        %v652 = vunpack.c.h.b16 %v219
        %v653 = vunpack.c.l.b16 %v220
        %v654 = vunpack.c.h.b16 %v220
        %v655 = vpack.c.b16 %v595, %v591
        %v656 = vpack.c.b16 %v596, %v592
        %v657 = vpack.c.b16 %v597, %v593
        %v658 = vpack.c.b16 %v598, %v594
        %v659 = vpack.c.b16 %v603, %v599
        %v660 = vpack.c.b16 %v604, %v600
        %v661 = vpack.c.b16 %v605, %v601
        %v662 = vpack.c.b16 %v606, %v602
        %v663 = vpack.c.b16 %v611, %v607
        %v664 = vpack.c.b16 %v612, %v608
        %v665 = vpack.c.b16 %v613, %v609
        %v666 = vpack.c.b16 %v614, %v610
        %v667 = vpack.c.b16 %v619, %v615
        %v668 = vpack.c.b16 %v620, %v616
        %v669 = vpack.c.b16 %v621, %v617
        %v670 = vpack.c.b16 %v622, %v618
        %v671 = vpack.c.b16 %v627, %v623
        %v672 = vpack.c.b16 %v628, %v624
        %v673 = vpack.c.b16 %v629, %v625
        %v674 = vpack.c.b16 %v630, %v626
        %v675 = vpack.c.b16 %v635, %v631
        %v676 = vpack.c.b16 %v636, %v632
        %v677 = vpack.c.b16 %v637, %v633
        %v678 = vpack.c.b16 %v638, %v634
        %v679 = vpack.c.b16 %v643, %v639
        %v680 = vpack.c.b16 %v644, %v640
        %v681 = vpack.c.b16 %v645, %v641
        %v682 = vpack.c.b16 %v646, %v642
        %v683 = vpack.c.b16 %v651, %v647
        %v684 = vpack.c.b16 %v652, %v648
        %v685 = vpack.c.b16 %v653, %v649
        %v686 = vpack.c.b16 %v654, %v650
        %719 = vmatprep.subr.bf16.mxu0 %v684
        %720 = vmatpush1.bf16.msra.mxu0 %v683
        %721 = vmatprep.subr.bf16.mxu0 %v680
        %722 = vmatpush1.bf16.msra.mxu0 %v679
        %723 = vmatprep.subr.bf16.mxu0 %v676
        %724 = vmatpush1.bf16.msra.mxu0 %v675
        %725 = vmatprep.subr.bf16.mxu0 %v672
        %726 = vmatpush1.bf16.msra.mxu0 %v671
        %727 = vmatprep.subr.bf16.mxu0 %v668
        %728 = vmatpush1.bf16.msra.mxu0 %v667
        %729 = vmatprep.subr.bf16.mxu0 %v664
        %730 = vmatpush1.bf16.msra.mxu0 %v663
        %731 = vmatprep.subr.bf16.mxu0 %v660
        %732 = vmatpush1.bf16.msra.mxu0 %v659
        %733 = vmatprep.subr.bf16.mxu0 %v656
        %734 = vmatpush1.bf16.msra.mxu0 %v655
        %735 = vmatprep.subr.bf16.mxu0 0
        %736 = vmatpush2.bf16.msra.mxu0 0
        %737 = vmatprep.subr.bf16.mxu0 0
        %738 = vmatpush2.bf16.msra.mxu0 0
        %739 = vmatprep.subr.bf16.mxu0 0
        %740 = vmatpush2.bf16.msra.mxu0 0
        %741 = vmatprep.subr.bf16.mxu0 0
        %742 = vmatpush2.bf16.msra.mxu0 0
        %743 = vmatprep.subr.bf16.mxu0 0
        %744 = vmatpush2.bf16.msra.mxu0 0
        %745 = vmatprep.subr.bf16.mxu0 0
        %746 = vmatpush2.bf16.msra.mxu0 0
        %747 = vmatprep.subr.bf16.mxu0 0
        %748 = vmatpush2.bf16.msra.mxu0 0
        %749 = vmatprep.subr.bf16.mxu0 0
        %750 = vmatpush2.bf16.msra.mxu0 0
        %751 = vmatprep.mubr.bf16.mxu0 0
        %752 = vmatmul.mubr.bf16.gmra.mxu0 %v265
        %v753 = vpop.f32.mrf.mxu0
        %v754 = vadd.f32 %v486, %v753
        %v755 = vpop.f32.mrf.mxu0
        %v756 = vadd.f32 %v488, %v755
        %v757 = vpop.f32.mrf.mxu0
        %v758 = vadd.f32 %v490, %v757
        %v759 = vpop.f32.mrf.mxu0
        %v760 = vadd.f32 %v492, %v759
        %761 = vmatprep.mubr.bf16.mxu0 0
        %762 = vmatmul.mubr.bf16.gmra.mxu0 %v266
        %v763 = vpop.f32.mrf.mxu0
        %v764 = vadd.f32 %v496, %v763
        %v765 = vpop.f32.mrf.mxu0
        %v766 = vadd.f32 %v498, %v765
        %v767 = vpop.f32.mrf.mxu0
        %v768 = vadd.f32 %v500, %v767
        %v769 = vpop.f32.mrf.mxu0
        %v770 = vadd.f32 %v502, %v769
        %771 = vdwg.mxu0
        %772 = vmatprep.subr.bf16.mxu0 %v686
        %773 = vmatpush1.bf16.msra.mxu0 %v685
        %774 = vmatprep.subr.bf16.mxu0 %v682
        %775 = vmatpush1.bf16.msra.mxu0 %v681
        %776 = vmatprep.subr.bf16.mxu0 %v678
        %777 = vmatpush1.bf16.msra.mxu0 %v677
        %778 = vmatprep.subr.bf16.mxu0 %v674
        %779 = vmatpush1.bf16.msra.mxu0 %v673
        %780 = vmatprep.subr.bf16.mxu0 %v670
        %781 = vmatpush1.bf16.msra.mxu0 %v669
        %782 = vmatprep.subr.bf16.mxu0 %v666
        %783 = vmatpush1.bf16.msra.mxu0 %v665
        %784 = vmatprep.subr.bf16.mxu0 %v662
        %785 = vmatpush1.bf16.msra.mxu0 %v661
        %786 = vmatprep.subr.bf16.mxu0 %v658
        %787 = vmatpush1.bf16.msra.mxu0 %v657
        %788 = vmatprep.subr.bf16.mxu0 0
        %789 = vmatpush2.bf16.msra.mxu0 0
        %790 = vmatprep.subr.bf16.mxu0 0
        %791 = vmatpush2.bf16.msra.mxu0 0
        %792 = vmatprep.subr.bf16.mxu0 0
        %793 = vmatpush2.bf16.msra.mxu0 0
        %794 = vmatprep.subr.bf16.mxu0 0
        %795 = vmatpush2.bf16.msra.mxu0 0
        %796 = vmatprep.subr.bf16.mxu0 0
        %797 = vmatpush2.bf16.msra.mxu0 0
        %798 = vmatprep.subr.bf16.mxu0 0
        %799 = vmatpush2.bf16.msra.mxu0 0
        %800 = vmatprep.subr.bf16.mxu0 0
        %801 = vmatpush2.bf16.msra.mxu0 0
        %802 = vmatprep.subr.bf16.mxu0 0
        %803 = vmatpush2.bf16.msra.mxu0 0
        %804 = vmatprep.mubr.bf16.mxu0 0
        %805 = vmatmul.mubr.bf16.gmra.mxu0 %v265
        %v806 = vpop.f32.mrf.mxu0
        %v807 = vadd.f32 %v539, %v806
        %v808 = vpop.f32.mrf.mxu0
        %v809 = vadd.f32 %v541, %v808
        %v810 = vpop.f32.mrf.mxu0
        %v811 = vadd.f32 %v543, %v810
        %v812 = vpop.f32.mrf.mxu0
        %v813 = vadd.f32 %v545, %v812
        %814 = vmatprep.mubr.bf16.mxu0 0
        %815 = vmatmul.mubr.bf16.gmra.mxu0 %v266
        %v816 = vpop.f32.mrf.mxu0
        %v817 = vadd.f32 %v549, %v816
        %v818 = vpop.f32.mrf.mxu0
        %v819 = vadd.f32 %v551, %v818
        %v820 = vpop.f32.mrf.mxu0
        %v821 = vadd.f32 %v553, %v820
        %v822 = vpop.f32.mrf.mxu0
        %v823 = vadd.f32 %v555, %v822
        %824 = vdwg.mxu0
        %v825 = vld [vmem:[%s183] sm:$0xe]
        %s826 = scalar_lea.vmem [#allocation2], 512
        %v827 = vld [vmem:[%s826] sm:$0xff]
        %v828 = vld [vmem:[%s826 + $0x8] sm:$0xff]
        %v829 = vld [vmem:[%s826 + $0x10] sm:$0xff]
        %v830 = vld [vmem:[%s826 + $0x18] sm:$0xff]
        %v831 = vld [vmem:[%s826 + $0x20] sm:$0xff]
        %v832 = vld [vmem:[%s826 + $0x28] sm:$0xff]
        %v833 = vld [vmem:[%s826 + $0x30] sm:$0xff]
        %v834 = vld [vmem:[%s826 + $0x38] sm:$0xff]
        %v835 = vld [vmem:[%s826 + $0x40] sm:$0xff]
        %v836 = vld [vmem:[%s826 + $0x48] sm:$0xff]
        %v837 = vld [vmem:[%s826 + $0x50] sm:$0xff]
        %v838 = vld [vmem:[%s826 + $0x58] sm:$0xff]
        %v839 = vld [vmem:[%s826 + $0x60] sm:$0xff]
        %v840 = vld [vmem:[%s826 + $0x68] sm:$0xff]
        %v841 = vld [vmem:[%s826 + $0x70] sm:$0xff]
        %v842 = vld [vmem:[%s826 + $0x78] sm:$0xff]
        %v843 = vld [vmem:[%s826 + $0x80] sm:$0xff]
        %v844 = vld [vmem:[%s826 + $0x88] sm:$0xff]
        %v845 = vld [vmem:[%s826 + $0x90] sm:$0xff]
        %v846 = vld [vmem:[%s826 + $0x98] sm:$0xff]
        %v847 = vld [vmem:[%s826 + $0xa0] sm:$0xff]
        %v848 = vld [vmem:[%s826 + $0xa8] sm:$0xff]
        %v849 = vld [vmem:[%s826 + $0xb0] sm:$0xff]
        %v850 = vld [vmem:[%s826 + $0xb8] sm:$0xff]
        %v851 = vld [vmem:[%s826 + $0xc0] sm:$0xff]
        %v852 = vld [vmem:[%s826 + $0xc8] sm:$0xff]
        %v853 = vld [vmem:[%s826 + $0xd0] sm:$0xff]
        %v854 = vld [vmem:[%s826 + $0xd8] sm:$0xff]
        %v855 = vld [vmem:[%s826 + $0xe0] sm:$0xff]
        %v856 = vld [vmem:[%s826 + $0xe8] sm:$0xff]
        %v857 = vld [vmem:[%s826 + $0xf0] sm:$0xff]
        %v858 = vld [vmem:[%s826 + $0xf8] sm:$0xff]
        %v860 = vunpack.c.l.b16 %v825
        %v861 = vpack.c.b16 %v261, %v860
        %vm862 = vcmask 1046528
        %v863 = vrot.slane %v861, 1
        %v864 = vrot.slane %v266, 1
        %v865 = vsel %vm862, %v863, %v864
        %v866 = vrot.slane %v267, 1
        %v867 = vsel %vm862, %v864, %v866
        %v902 = vunpack.c.l.b16 %v827
        %v903 = vunpack.c.h.b16 %v827
        %v904 = vunpack.c.l.b16 %v828
        %v905 = vunpack.c.h.b16 %v828
        %v906 = vunpack.c.l.b16 %v829
        %v907 = vunpack.c.h.b16 %v829
        %v908 = vunpack.c.l.b16 %v830
        %v909 = vunpack.c.h.b16 %v830
        %v910 = vunpack.c.l.b16 %v831
        %v911 = vunpack.c.h.b16 %v831
        %v912 = vunpack.c.l.b16 %v832
        %v913 = vunpack.c.h.b16 %v832
        %v914 = vunpack.c.l.b16 %v833
        %v915 = vunpack.c.h.b16 %v833
        %v916 = vunpack.c.l.b16 %v834
        %v917 = vunpack.c.h.b16 %v834
        %v918 = vunpack.c.l.b16 %v835
        %v919 = vunpack.c.h.b16 %v835
        %v920 = vunpack.c.l.b16 %v836
        %v921 = vunpack.c.h.b16 %v836
        %v922 = vunpack.c.l.b16 %v837
        %v923 = vunpack.c.h.b16 %v837
        %v924 = vunpack.c.l.b16 %v838
        %v925 = vunpack.c.h.b16 %v838
        %v926 = vunpack.c.l.b16 %v839
        %v927 = vunpack.c.h.b16 %v839
        %v928 = vunpack.c.l.b16 %v840
        %v929 = vunpack.c.h.b16 %v840
        %v930 = vunpack.c.l.b16 %v841
        %v931 = vunpack.c.h.b16 %v841
        %v932 = vunpack.c.l.b16 %v842
        %v933 = vunpack.c.h.b16 %v842
        %v934 = vunpack.c.l.b16 %v843
        %v935 = vunpack.c.h.b16 %v843
        %v936 = vunpack.c.l.b16 %v844
        %v937 = vunpack.c.h.b16 %v844
        %v938 = vunpack.c.l.b16 %v845
        %v939 = vunpack.c.h.b16 %v845
        %v940 = vunpack.c.l.b16 %v846
        %v941 = vunpack.c.h.b16 %v846
        %v942 = vunpack.c.l.b16 %v847
        %v943 = vunpack.c.h.b16 %v847
        %v944 = vunpack.c.l.b16 %v848
        %v945 = vunpack.c.h.b16 %v848
        %v946 = vunpack.c.l.b16 %v849
        %v947 = vunpack.c.h.b16 %v849
        %v948 = vunpack.c.l.b16 %v850
        %v949 = vunpack.c.h.b16 %v850
        %v950 = vunpack.c.l.b16 %v851
        %v951 = vunpack.c.h.b16 %v851
        %v952 = vunpack.c.l.b16 %v852
        %v953 = vunpack.c.h.b16 %v852
        %v954 = vunpack.c.l.b16 %v853
        %v955 = vunpack.c.h.b16 %v853
        %v956 = vunpack.c.l.b16 %v854
        %v957 = vunpack.c.h.b16 %v854
        %v958 = vunpack.c.l.b16 %v855
        %v959 = vunpack.c.h.b16 %v855
        %v960 = vunpack.c.l.b16 %v856
        %v961 = vunpack.c.h.b16 %v856
        %v962 = vunpack.c.l.b16 %v857
        %v963 = vunpack.c.h.b16 %v857
        %v964 = vunpack.c.l.b16 %v858
        %v965 = vunpack.c.h.b16 %v858
        %v966 = vpack.c.b16 %v906, %v902
        %v967 = vpack.c.b16 %v907, %v903
        %v968 = vpack.c.b16 %v908, %v904
        %v969 = vpack.c.b16 %v909, %v905
        %v970 = vpack.c.b16 %v914, %v910
        %v971 = vpack.c.b16 %v915, %v911
        %v972 = vpack.c.b16 %v916, %v912
        %v973 = vpack.c.b16 %v917, %v913
        %v974 = vpack.c.b16 %v922, %v918
        %v975 = vpack.c.b16 %v923, %v919
        %v976 = vpack.c.b16 %v924, %v920
        %v977 = vpack.c.b16 %v925, %v921
        %v978 = vpack.c.b16 %v930, %v926
        %v979 = vpack.c.b16 %v931, %v927
        %v980 = vpack.c.b16 %v932, %v928
        %v981 = vpack.c.b16 %v933, %v929
        %v982 = vpack.c.b16 %v938, %v934
        %v983 = vpack.c.b16 %v939, %v935
        %v984 = vpack.c.b16 %v940, %v936
        %v985 = vpack.c.b16 %v941, %v937
        %v986 = vpack.c.b16 %v946, %v942
        %v987 = vpack.c.b16 %v947, %v943
        %v988 = vpack.c.b16 %v948, %v944
        %v989 = vpack.c.b16 %v949, %v945
        %v990 = vpack.c.b16 %v954, %v950
        %v991 = vpack.c.b16 %v955, %v951
        %v992 = vpack.c.b16 %v956, %v952
        %v993 = vpack.c.b16 %v957, %v953
        %v994 = vpack.c.b16 %v962, %v958
        %v995 = vpack.c.b16 %v963, %v959
        %v996 = vpack.c.b16 %v964, %v960
        %v997 = vpack.c.b16 %v965, %v961
        %1030 = vmatprep.subr.bf16.mxu0 %v995
        %1031 = vmatpush1.bf16.msra.mxu0 %v994
        %1032 = vmatprep.subr.bf16.mxu0 %v991
        %1033 = vmatpush1.bf16.msra.mxu0 %v990
        %1034 = vmatprep.subr.bf16.mxu0 %v987
        %1035 = vmatpush1.bf16.msra.mxu0 %v986
        %1036 = vmatprep.subr.bf16.mxu0 %v983
        %1037 = vmatpush1.bf16.msra.mxu0 %v982
        %1038 = vmatprep.subr.bf16.mxu0 %v979
        %1039 = vmatpush1.bf16.msra.mxu0 %v978
        %1040 = vmatprep.subr.bf16.mxu0 %v975
        %1041 = vmatpush1.bf16.msra.mxu0 %v974
        %1042 = vmatprep.subr.bf16.mxu0 %v971
        %1043 = vmatpush1.bf16.msra.mxu0 %v970
        %1044 = vmatprep.subr.bf16.mxu0 %v967
        %1045 = vmatpush1.bf16.msra.mxu0 %v966
        %1046 = vmatprep.subr.bf16.mxu0 0
        %1047 = vmatpush2.bf16.msra.mxu0 0
        %1048 = vmatprep.subr.bf16.mxu0 0
        %1049 = vmatpush2.bf16.msra.mxu0 0
        %1050 = vmatprep.subr.bf16.mxu0 0
        %1051 = vmatpush2.bf16.msra.mxu0 0
        %1052 = vmatprep.subr.bf16.mxu0 0
        %1053 = vmatpush2.bf16.msra.mxu0 0
        %1054 = vmatprep.subr.bf16.mxu0 0
        %1055 = vmatpush2.bf16.msra.mxu0 0
        %1056 = vmatprep.subr.bf16.mxu0 0
        %1057 = vmatpush2.bf16.msra.mxu0 0
        %1058 = vmatprep.subr.bf16.mxu0 0
        %1059 = vmatpush2.bf16.msra.mxu0 0
        %1060 = vmatprep.subr.bf16.mxu0 0
        %1061 = vmatpush2.bf16.msra.mxu0 0
        %1062 = vmatprep.mubr.bf16.mxu0 0
        %1063 = vmatmul.mubr.bf16.gmra.mxu0 %v865
        %v1064 = vpop.f32.mrf.mxu0
        %v1065 = vadd.f32 0.0, %v1064
        %v1066 = vpop.f32.mrf.mxu0
        %v1067 = vadd.f32 0.0, %v1066
        %v1068 = vpop.f32.mrf.mxu0
        %v1069 = vadd.f32 0.0, %v1068
        %v1070 = vpop.f32.mrf.mxu0
        %v1071 = vadd.f32 0.0, %v1070
        %1072 = vmatprep.mubr.bf16.mxu0 0
        %1073 = vmatmul.mubr.bf16.gmra.mxu0 %v867
        %v1074 = vpop.f32.mrf.mxu0
        %v1075 = vadd.f32 0.0, %v1074
        %v1076 = vpop.f32.mrf.mxu0
        %v1077 = vadd.f32 0.0, %v1076
        %v1078 = vpop.f32.mrf.mxu0
        %v1079 = vadd.f32 0.0, %v1078
        %v1080 = vpop.f32.mrf.mxu0
        %v1081 = vadd.f32 0.0, %v1080
        %1082 = vdwg.mxu0
        %1083 = vmatprep.subr.bf16.mxu0 %v997
        %1084 = vmatpush1.bf16.msra.mxu0 %v996
        %1085 = vmatprep.subr.bf16.mxu0 %v993
        %1086 = vmatpush1.bf16.msra.mxu0 %v992
        %1087 = vmatprep.subr.bf16.mxu0 %v989
        %1088 = vmatpush1.bf16.msra.mxu0 %v988
        %1089 = vmatprep.subr.bf16.mxu0 %v985
        %1090 = vmatpush1.bf16.msra.mxu0 %v984
        %1091 = vmatprep.subr.bf16.mxu0 %v981
        %1092 = vmatpush1.bf16.msra.mxu0 %v980
        %1093 = vmatprep.subr.bf16.mxu0 %v977
        %1094 = vmatpush1.bf16.msra.mxu0 %v976
        %1095 = vmatprep.subr.bf16.mxu0 %v973
        %1096 = vmatpush1.bf16.msra.mxu0 %v972
        %1097 = vmatprep.subr.bf16.mxu0 %v969
        %1098 = vmatpush1.bf16.msra.mxu0 %v968
        %1099 = vmatprep.subr.bf16.mxu0 0
        %1100 = vmatpush2.bf16.msra.mxu0 0
        %1101 = vmatprep.subr.bf16.mxu0 0
        %1102 = vmatpush2.bf16.msra.mxu0 0
        %1103 = vmatprep.subr.bf16.mxu0 0
        %1104 = vmatpush2.bf16.msra.mxu0 0
        %1105 = vmatprep.subr.bf16.mxu0 0
        %1106 = vmatpush2.bf16.msra.mxu0 0
        %1107 = vmatprep.subr.bf16.mxu0 0
        %1108 = vmatpush2.bf16.msra.mxu0 0
        %1109 = vmatprep.subr.bf16.mxu0 0
        %1110 = vmatpush2.bf16.msra.mxu0 0
        %1111 = vmatprep.subr.bf16.mxu0 0
        %1112 = vmatpush2.bf16.msra.mxu0 0
        %1113 = vmatprep.subr.bf16.mxu0 0
        %1114 = vmatpush2.bf16.msra.mxu0 0
        %1115 = vmatprep.mubr.bf16.mxu0 0
        %1116 = vmatmul.mubr.bf16.gmra.mxu0 %v865
        %v1117 = vpop.f32.mrf.mxu0
        %v1118 = vadd.f32 0.0, %v1117
        %v1119 = vpop.f32.mrf.mxu0
        %v1120 = vadd.f32 0.0, %v1119
        %v1121 = vpop.f32.mrf.mxu0
        %v1122 = vadd.f32 0.0, %v1121
        %v1123 = vpop.f32.mrf.mxu0
        %v1124 = vadd.f32 0.0, %v1123
        %1125 = vmatprep.mubr.bf16.mxu0 0
        %1126 = vmatmul.mubr.bf16.gmra.mxu0 %v867
        %v1127 = vpop.f32.mrf.mxu0
        %v1128 = vadd.f32 0.0, %v1127
        %v1129 = vpop.f32.mrf.mxu0
        %v1130 = vadd.f32 0.0, %v1129
        %v1131 = vpop.f32.mrf.mxu0
        %v1132 = vadd.f32 0.0, %v1131
        %v1133 = vpop.f32.mrf.mxu0
        %v1134 = vadd.f32 0.0, %v1133
        %1135 = vdwg.mxu0
        %v1136 = vadd.f32 %v754, %v1065
        %v1137 = vadd.f32 %v756, %v1067
        %v1138 = vadd.f32 %v807, %v1118
        %v1139 = vadd.f32 %v809, %v1120
        %v1140 = vadd.f32 %v758, %v1069
        %v1141 = vadd.f32 %v760, %v1071
        %v1142 = vadd.f32 %v811, %v1122
        %v1143 = vadd.f32 %v813, %v1124
        %v1144 = vadd.f32 %v764, %v1075
        %v1145 = vadd.f32 %v766, %v1077
        %v1146 = vadd.f32 %v817, %v1128
        %v1147 = vadd.f32 %v819, %v1130
        %v1148 = vadd.f32 %v768, %v1079
        %v1149 = vadd.f32 %v770, %v1081
        %v1150 = vadd.f32 %v821, %v1132
        %v1151 = vadd.f32 %v823, %v1134
        %v1152 = vld [vmem:[%s183 + $0x10] sm:$0x3]
        %s1153 = scalar_lea.vmem [#allocation2], 768
        %v1154 = vld [vmem:[%s1153] sm:$0xff]
        %v1155 = vld [vmem:[%s1153 + $0x8] sm:$0xff]
        %v1156 = vld [vmem:[%s1153 + $0x10] sm:$0xff]
        %v1157 = vld [vmem:[%s1153 + $0x18] sm:$0xff]
        %v1158 = vld [vmem:[%s1153 + $0x20] sm:$0xff]
        %v1159 = vld [vmem:[%s1153 + $0x28] sm:$0xff]
        %v1160 = vld [vmem:[%s1153 + $0x30] sm:$0xff]
        %v1161 = vld [vmem:[%s1153 + $0x38] sm:$0xff]
        %v1162 = vld [vmem:[%s1153 + $0x40] sm:$0xff]
        %v1163 = vld [vmem:[%s1153 + $0x48] sm:$0xff]
        %v1164 = vld [vmem:[%s1153 + $0x50] sm:$0xff]
        %v1165 = vld [vmem:[%s1153 + $0x58] sm:$0xff]
        %v1166 = vld [vmem:[%s1153 + $0x60] sm:$0xff]
        %v1167 = vld [vmem:[%s1153 + $0x68] sm:$0xff]
        %v1168 = vld [vmem:[%s1153 + $0x70] sm:$0xff]
        %v1169 = vld [vmem:[%s1153 + $0x78] sm:$0xff]
        %v1170 = vld [vmem:[%s1153 + $0x80] sm:$0xff]
        %v1171 = vld [vmem:[%s1153 + $0x88] sm:$0xff]
        %v1172 = vld [vmem:[%s1153 + $0x90] sm:$0xff]
        %v1173 = vld [vmem:[%s1153 + $0x98] sm:$0xff]
        %v1174 = vld [vmem:[%s1153 + $0xa0] sm:$0xff]
        %v1175 = vld [vmem:[%s1153 + $0xa8] sm:$0xff]
        %v1176 = vld [vmem:[%s1153 + $0xb0] sm:$0xff]
        %v1177 = vld [vmem:[%s1153 + $0xb8] sm:$0xff]
        %v1178 = vld [vmem:[%s1153 + $0xc0] sm:$0xff]
        %v1179 = vld [vmem:[%s1153 + $0xc8] sm:$0xff]
        %v1180 = vld [vmem:[%s1153 + $0xd0] sm:$0xff]
        %v1181 = vld [vmem:[%s1153 + $0xd8] sm:$0xff]
        %v1182 = vld [vmem:[%s1153 + $0xe0] sm:$0xff]
        %v1183 = vld [vmem:[%s1153 + $0xe8] sm:$0xff]
        %v1184 = vld [vmem:[%s1153 + $0xf0] sm:$0xff]
        %v1185 = vld [vmem:[%s1153 + $0xf8] sm:$0xff]
        %v1187 = vunpack.c.l.b16 %v1152
        %v1188 = vpack.c.b16 %v1187, %v1187
        %vm1189 = vsmask.f32 6400
        %v1191 = vshrl.u32 %v861, 16
        %v1193 = vrot.slane %v1191, 1
        %v1194 = vshll.u32 %v861, 16
        %v1196 = vrot.slane %v1194, 2
        %v1197 = vor.u32 %v1193, %v1196
        %v1198 = vrot.slane %v281, 1
        %v1199 = vrot.slane %v277, 2
        %v1200 = vor.u32 %v1198, %v1199
        %v1201 = vsel %vm1189, %v1197, %v1200
        %v1203 = vshrl.u32 %v1188, 16
        %v1205 = vrot.slane %v1203, 1
        %v1206 = vshll.u32 %v1188, 16
        %v1208 = vrot.slane %v1206, 2
        %v1209 = vor.u32 %v1205, %v1208
        %v1210 = vsel %vm1189, %v1200, %v1209
        %v1245 = vunpack.c.l.b16 %v1154
        %v1246 = vunpack.c.h.b16 %v1154
        %v1247 = vunpack.c.l.b16 %v1155
        %v1248 = vunpack.c.h.b16 %v1155
        %v1249 = vunpack.c.l.b16 %v1156
        %v1250 = vunpack.c.h.b16 %v1156
        %v1251 = vunpack.c.l.b16 %v1157
        %v1252 = vunpack.c.h.b16 %v1157
        %v1253 = vunpack.c.l.b16 %v1158
        %v1254 = vunpack.c.h.b16 %v1158
        %v1255 = vunpack.c.l.b16 %v1159
        %v1256 = vunpack.c.h.b16 %v1159
        %v1257 = vunpack.c.l.b16 %v1160
        %v1258 = vunpack.c.h.b16 %v1160
        %v1259 = vunpack.c.l.b16 %v1161
        %v1260 = vunpack.c.h.b16 %v1161
        %v1261 = vunpack.c.l.b16 %v1162
        %v1262 = vunpack.c.h.b16 %v1162
        %v1263 = vunpack.c.l.b16 %v1163
        %v1264 = vunpack.c.h.b16 %v1163
        %v1265 = vunpack.c.l.b16 %v1164
        %v1266 = vunpack.c.h.b16 %v1164
        %v1267 = vunpack.c.l.b16 %v1165
        %v1268 = vunpack.c.h.b16 %v1165
        %v1269 = vunpack.c.l.b16 %v1166
        %v1270 = vunpack.c.h.b16 %v1166
        %v1271 = vunpack.c.l.b16 %v1167
        %v1272 = vunpack.c.h.b16 %v1167
        %v1273 = vunpack.c.l.b16 %v1168
        %v1274 = vunpack.c.h.b16 %v1168
        %v1275 = vunpack.c.l.b16 %v1169
        %v1276 = vunpack.c.h.b16 %v1169
        %v1277 = vunpack.c.l.b16 %v1170
        %v1278 = vunpack.c.h.b16 %v1170
        %v1279 = vunpack.c.l.b16 %v1171
        %v1280 = vunpack.c.h.b16 %v1171
        %v1281 = vunpack.c.l.b16 %v1172
        %v1282 = vunpack.c.h.b16 %v1172
        %v1283 = vunpack.c.l.b16 %v1173
        %v1284 = vunpack.c.h.b16 %v1173
        %v1285 = vunpack.c.l.b16 %v1174
        %v1286 = vunpack.c.h.b16 %v1174
        %v1287 = vunpack.c.l.b16 %v1175
        %v1288 = vunpack.c.h.b16 %v1175
        %v1289 = vunpack.c.l.b16 %v1176
        %v1290 = vunpack.c.h.b16 %v1176
        %v1291 = vunpack.c.l.b16 %v1177
        %v1292 = vunpack.c.h.b16 %v1177
        %v1293 = vunpack.c.l.b16 %v1178
        %v1294 = vunpack.c.h.b16 %v1178
        %v1295 = vunpack.c.l.b16 %v1179
        %v1296 = vunpack.c.h.b16 %v1179
        %v1297 = vunpack.c.l.b16 %v1180
        %v1298 = vunpack.c.h.b16 %v1180
        %v1299 = vunpack.c.l.b16 %v1181
        %v1300 = vunpack.c.h.b16 %v1181
        %v1301 = vunpack.c.l.b16 %v1182
        %v1302 = vunpack.c.h.b16 %v1182
        %v1303 = vunpack.c.l.b16 %v1183
        %v1304 = vunpack.c.h.b16 %v1183
        %v1305 = vunpack.c.l.b16 %v1184
        %v1306 = vunpack.c.h.b16 %v1184
        %v1307 = vunpack.c.l.b16 %v1185
        %v1308 = vunpack.c.h.b16 %v1185
        %v1309 = vpack.c.b16 %v1249, %v1245
        %v1310 = vpack.c.b16 %v1250, %v1246
        %v1311 = vpack.c.b16 %v1251, %v1247
        %v1312 = vpack.c.b16 %v1252, %v1248
        %v1313 = vpack.c.b16 %v1257, %v1253
        %v1314 = vpack.c.b16 %v1258, %v1254
        %v1315 = vpack.c.b16 %v1259, %v1255
        %v1316 = vpack.c.b16 %v1260, %v1256
        %v1317 = vpack.c.b16 %v1265, %v1261
        %v1318 = vpack.c.b16 %v1266, %v1262
        %v1319 = vpack.c.b16 %v1267, %v1263
        %v1320 = vpack.c.b16 %v1268, %v1264
        %v1321 = vpack.c.b16 %v1273, %v1269
        %v1322 = vpack.c.b16 %v1274, %v1270
        %v1323 = vpack.c.b16 %v1275, %v1271
        %v1324 = vpack.c.b16 %v1276, %v1272
        %v1325 = vpack.c.b16 %v1281, %v1277
        %v1326 = vpack.c.b16 %v1282, %v1278
        %v1327 = vpack.c.b16 %v1283, %v1279
        %v1328 = vpack.c.b16 %v1284, %v1280
        %v1329 = vpack.c.b16 %v1289, %v1285
        %v1330 = vpack.c.b16 %v1290, %v1286
        %v1331 = vpack.c.b16 %v1291, %v1287
        %v1332 = vpack.c.b16 %v1292, %v1288
        %v1333 = vpack.c.b16 %v1297, %v1293
        %v1334 = vpack.c.b16 %v1298, %v1294
        %v1335 = vpack.c.b16 %v1299, %v1295
        %v1336 = vpack.c.b16 %v1300, %v1296
        %v1337 = vpack.c.b16 %v1305, %v1301
        %v1338 = vpack.c.b16 %v1306, %v1302
        %v1339 = vpack.c.b16 %v1307, %v1303
        %v1340 = vpack.c.b16 %v1308, %v1304
        %1373 = vmatprep.subr.bf16.mxu0 %v1338
        %1374 = vmatpush1.bf16.msra.mxu0 %v1337
        %1375 = vmatprep.subr.bf16.mxu0 %v1334
        %1376 = vmatpush1.bf16.msra.mxu0 %v1333
        %1377 = vmatprep.subr.bf16.mxu0 %v1330
        %1378 = vmatpush1.bf16.msra.mxu0 %v1329
        %1379 = vmatprep.subr.bf16.mxu0 %v1326
        %1380 = vmatpush1.bf16.msra.mxu0 %v1325
        %1381 = vmatprep.subr.bf16.mxu0 %v1322
        %1382 = vmatpush1.bf16.msra.mxu0 %v1321
        %1383 = vmatprep.subr.bf16.mxu0 %v1318
        %1384 = vmatpush1.bf16.msra.mxu0 %v1317
        %1385 = vmatprep.subr.bf16.mxu0 %v1314
        %1386 = vmatpush1.bf16.msra.mxu0 %v1313
        %1387 = vmatprep.subr.bf16.mxu0 %v1310
        %1388 = vmatpush1.bf16.msra.mxu0 %v1309
        %1389 = vmatprep.subr.bf16.mxu0 0
        %1390 = vmatpush2.bf16.msra.mxu0 0
        %1391 = vmatprep.subr.bf16.mxu0 0
        %1392 = vmatpush2.bf16.msra.mxu0 0
        %1393 = vmatprep.subr.bf16.mxu0 0
        %1394 = vmatpush2.bf16.msra.mxu0 0
        %1395 = vmatprep.subr.bf16.mxu0 0
        %1396 = vmatpush2.bf16.msra.mxu0 0
        %1397 = vmatprep.subr.bf16.mxu0 0
        %1398 = vmatpush2.bf16.msra.mxu0 0
        %1399 = vmatprep.subr.bf16.mxu0 0
        %1400 = vmatpush2.bf16.msra.mxu0 0
        %1401 = vmatprep.subr.bf16.mxu0 0
        %1402 = vmatpush2.bf16.msra.mxu0 0
        %1403 = vmatprep.subr.bf16.mxu0 0
        %1404 = vmatpush2.bf16.msra.mxu0 0
        %1405 = vmatprep.mubr.bf16.mxu0 0
        %1406 = vmatmul.mubr.bf16.gmra.mxu0 %v1201
        %v1407 = vpop.f32.mrf.mxu0
        %v1408 = vadd.f32 0.0, %v1407
        %v1409 = vpop.f32.mrf.mxu0
        %v1410 = vadd.f32 0.0, %v1409
        %v1411 = vpop.f32.mrf.mxu0
        %v1412 = vadd.f32 0.0, %v1411
        %v1413 = vpop.f32.mrf.mxu0
        %v1414 = vadd.f32 0.0, %v1413
        %1415 = vmatprep.mubr.bf16.mxu0 0
        %1416 = vmatmul.mubr.bf16.gmra.mxu0 %v1210
        %v1417 = vpop.f32.mrf.mxu0
        %v1418 = vadd.f32 0.0, %v1417
        %v1419 = vpop.f32.mrf.mxu0
        %v1420 = vadd.f32 0.0, %v1419
        %v1421 = vpop.f32.mrf.mxu0
        %v1422 = vadd.f32 0.0, %v1421
        %v1423 = vpop.f32.mrf.mxu0
        %v1424 = vadd.f32 0.0, %v1423
        %1425 = vdwg.mxu0
        %1426 = vmatprep.subr.bf16.mxu0 %v1340
        %1427 = vmatpush1.bf16.msra.mxu0 %v1339
        %1428 = vmatprep.subr.bf16.mxu0 %v1336
        %1429 = vmatpush1.bf16.msra.mxu0 %v1335
        %1430 = vmatprep.subr.bf16.mxu0 %v1332
        %1431 = vmatpush1.bf16.msra.mxu0 %v1331
        %1432 = vmatprep.subr.bf16.mxu0 %v1328
        %1433 = vmatpush1.bf16.msra.mxu0 %v1327
        %1434 = vmatprep.subr.bf16.mxu0 %v1324
        %1435 = vmatpush1.bf16.msra.mxu0 %v1323
        %1436 = vmatprep.subr.bf16.mxu0 %v1320
        %1437 = vmatpush1.bf16.msra.mxu0 %v1319
        %1438 = vmatprep.subr.bf16.mxu0 %v1316
        %1439 = vmatpush1.bf16.msra.mxu0 %v1315
        %1440 = vmatprep.subr.bf16.mxu0 %v1312
        %1441 = vmatpush1.bf16.msra.mxu0 %v1311
        %1442 = vmatprep.subr.bf16.mxu0 0
        %1443 = vmatpush2.bf16.msra.mxu0 0
        %1444 = vmatprep.subr.bf16.mxu0 0
        %1445 = vmatpush2.bf16.msra.mxu0 0
        %1446 = vmatprep.subr.bf16.mxu0 0
        %1447 = vmatpush2.bf16.msra.mxu0 0
        %1448 = vmatprep.subr.bf16.mxu0 0
        %1449 = vmatpush2.bf16.msra.mxu0 0
        %1450 = vmatprep.subr.bf16.mxu0 0
        %1451 = vmatpush2.bf16.msra.mxu0 0
        %1452 = vmatprep.subr.bf16.mxu0 0
        %1453 = vmatpush2.bf16.msra.mxu0 0
        %1454 = vmatprep.subr.bf16.mxu0 0
        %1455 = vmatpush2.bf16.msra.mxu0 0
        %1456 = vmatprep.subr.bf16.mxu0 0
        %1457 = vmatpush2.bf16.msra.mxu0 0
        %1458 = vmatprep.mubr.bf16.mxu0 0
        %1459 = vmatmul.mubr.bf16.gmra.mxu0 %v1201
        %v1460 = vpop.f32.mrf.mxu0
        %v1461 = vadd.f32 0.0, %v1460
        %v1462 = vpop.f32.mrf.mxu0
        %v1463 = vadd.f32 0.0, %v1462
        %v1464 = vpop.f32.mrf.mxu0
        %v1465 = vadd.f32 0.0, %v1464
        %v1466 = vpop.f32.mrf.mxu0
        %v1467 = vadd.f32 0.0, %v1466
        %1468 = vmatprep.mubr.bf16.mxu0 0
        %1469 = vmatmul.mubr.bf16.gmra.mxu0 %v1210
        %v1470 = vpop.f32.mrf.mxu0
        %v1471 = vadd.f32 0.0, %v1470
        %v1472 = vpop.f32.mrf.mxu0
        %v1473 = vadd.f32 0.0, %v1472
        %v1474 = vpop.f32.mrf.mxu0
        %v1475 = vadd.f32 0.0, %v1474
        %v1476 = vpop.f32.mrf.mxu0
        %v1477 = vadd.f32 0.0, %v1476
        %1478 = vdwg.mxu0
        %v1479 = vadd.f32 %v1136, %v1408
        %v1480 = vadd.f32 %v1137, %v1410
        %v1481 = vadd.f32 %v1138, %v1461
        %v1482 = vadd.f32 %v1139, %v1463
        %v1483 = vadd.f32 %v1140, %v1412
        %v1484 = vadd.f32 %v1141, %v1414
        %v1485 = vadd.f32 %v1142, %v1465
        %v1486 = vadd.f32 %v1143, %v1467
        %v1487 = vadd.f32 %v1144, %v1418
        %v1488 = vadd.f32 %v1145, %v1420
        %v1489 = vadd.f32 %v1146, %v1471
        %v1490 = vadd.f32 %v1147, %v1473
        %v1491 = vadd.f32 %v1148, %v1422
        %v1492 = vadd.f32 %v1149, %v1424
        %v1493 = vadd.f32 %v1150, %v1475
        %v1494 = vadd.f32 %v1151, %v1477
        %v1495 = vld [vmem:[%s2] sm:$0xf]
        %v1497 = vlaneseq
        %v1498 = vshrl.u32 %v1497, 7
        %v1499 = vsub.s32 0, %v1498
        %v1500 = vrot.slane %v1495, %v1499
        %v1501 = vlaneseq
        %v1502 = vshrl.u32 %v1501, 7
        %v1503 = vsub.s32 1, %v1502
        %v1504 = vrot.slane %v1495, %v1503
        %v1505 = vlaneseq
        %v1506 = vshrl.u32 %v1505, 7
        %v1507 = vsub.s32 2, %v1506
        %v1508 = vrot.slane %v1495, %v1507
        %v1509 = vlaneseq
        %v1510 = vshrl.u32 %v1509, 7
        %v1511 = vsub.s32 3, %v1510
        %v1512 = vrot.slane %v1495, %v1511
        %v1517 = vadd.f32 %v1479, %v1500
        %v1518 = vadd.f32 %v1480, %v1504
        %v1519 = vadd.f32 %v1481, %v1508
        %v1520 = vadd.f32 %v1482, %v1512
        %v1521 = vadd.f32 %v1483, %v1500
        %v1522 = vadd.f32 %v1484, %v1504
        %v1523 = vadd.f32 %v1485, %v1508
        %v1524 = vadd.f32 %v1486, %v1512
        %v1525 = vadd.f32 %v1487, %v1500
        %v1526 = vadd.f32 %v1488, %v1504
        %v1527 = vadd.f32 %v1489, %v1508
        %v1528 = vadd.f32 %v1490, %v1512
        %v1529 = vadd.f32 %v1491, %v1500
        %v1530 = vadd.f32 %v1492, %v1504
        %v1531 = vadd.f32 %v1493, %v1508
        %v1532 = vadd.f32 %v1494, %v1512
        %1533 = vst [vmem:[%s178] sm:$0xff] %v1517
        %1534 = vst [vmem:[%s178 + $0x8] sm:$0xff] %v1518
        %1535 = vst [vmem:[%s178 + $0x10] sm:$0xff] %v1519
        %1536 = vst [vmem:[%s178 + $0x18] sm:$0xff] %v1520
        %1537 = vst [vmem:[%s178 + $0x20] sm:$0xff] %v1521
        %1538 = vst [vmem:[%s178 + $0x28] sm:$0xff] %v1522
        %1539 = vst [vmem:[%s178 + $0x30] sm:$0xff] %v1523
        %1540 = vst [vmem:[%s178 + $0x38] sm:$0xff] %v1524
        %1541 = vst [vmem:[%s178 + $0x40] sm:$0xff] %v1525
        %1542 = vst [vmem:[%s178 + $0x48] sm:$0xff] %v1526
        %1543 = vst [vmem:[%s178 + $0x50] sm:$0xff] %v1527
        %1544 = vst [vmem:[%s178 + $0x58] sm:$0xff] %v1528
        %1545 = vst [vmem:[%s178 + $0x60] sm:$0xff] %v1529
        %1546 = vst [vmem:[%s178 + $0x68] sm:$0xff] %v1530
        %1547 = vst [vmem:[%s178 + $0x70] sm:$0xff] %v1531
        %1548 = vst [vmem:[%s178 + $0x78] sm:$0xff] %v1532
        %s1549 = sand.u32 %s94, 1
        %s1550 = scalar_lea.sflag [#allocation4], %s1549
        %s1551 = sand.u32 %s94, 1
        %s1552 = smul.addr %s1551, 128
        %s1553 = scalar_lea.vmem [#allocation5], %s1552
        // Predicated region
        $region37: #{tpu_custom_call.1} parent=31 // pred_check
          %p1554 = pneg %p104
        $region38: #{tpu_custom_call.1} parent=31 // pred_check_branch
          %1556 = sbr.rel (%p1554) target = $region40
        $region39: #{tpu_custom_call.1} parent=31 // pred_region
          %s1558 = ssub.s32 2048, 2048
          %1559 = vsyncadd %s1550, %s1558
          %s1560 = smul.addr %s18, 16
          %s1561 = smul.addr %s1560, 128
          %s1562 = scalar_lea.hbm %s3, %s1561
          %s1563 = sshll.u32 %s1553, 4
          %s1564 = int_to_ptr.vmem [resolvable:$true] %s1563
          %1569 = dma.vmem_to_hbm [thread:$0]  %s1564, 2048, %s1562, %s1550, 512, 512, 32
        $region40: #{tpu_custom_call.1} parent=31 // pred_fallthru
          _
      $region32: #{tpu_custom_call.1} parent=5 // pred_fallthru
        _
      %p1570 = scmp.le.s32.totalorder 2, %s13
      // Predicated region
      $region41: #{tpu_custom_call.1} parent=5 // pred_check
        %p1571 = pneg %p1570
      $region42: #{tpu_custom_call.1} parent=5 // pred_check_branch
        %1573 = sbr.rel (%p1571) target = $region44
      $region43: #{tpu_custom_call.1} parent=5 // pred_region
        %s1574 = ssub.s32 %s13, 2
        // Predicated region
        $region45: #{tpu_custom_call.1} parent=43 // pred_check
          %p1575 = pneg %p110
        $region46: #{tpu_custom_call.1} parent=43 // pred_check_branch
          %1577 = sbr.rel (%p1575) target = $region48
        $region47: #{tpu_custom_call.1} parent=43 // pred_region
          %s1578 = sand.u32 %s95, 1
          %s1579 = scalar_lea.sflag [#allocation4], %s1578
          %s1580 = sand.u32 %s95, 1
          %s1581 = smul.addr %s1580, 128
          %s1582 = scalar_lea.vmem [#allocation5], %s1581
          %1583 = dma.done %s1579, 2048
        $region48: #{tpu_custom_call.1} parent=43 // pred_fallthru
          _
      $region44: #{tpu_custom_call.1} parent=5 // pred_fallthru
        _
    $region6: #{tpu_custom_call.1} parent=1 // loop_footer
      %s17 = sadd.s32 1, %s13
    $region7: #{tpu_custom_call.1} parent=1 // loop_footer_branch
      %12 = sbr.rel target = $region3
    $region8: #{tpu_custom_call.1} parent=1 // loop_exit
      _
    %1584 = vsyncpa [#allocation3], 1
    %s1585 = scalar_lea.sflag [#allocation3], 1
    %1586 = vsyncpa %s1585, 1
    %1587 = vsyncpa [#allocation4], 1
    %s1588 = scalar_lea.sflag [#allocation4], 1
    %1589 = vsyncpa %s1588, 1

</llo_original>
